<compile_context>
chip_gen: v7x
topology: tpu7x:2x2x1
jax: 0.10.0
libtpu: 0.0.40
codegen_flags: <defaults>
</compile_context>

<pallas_src>
import math

import jax
import jax.numpy as jnp
from jax.experimental import pallas as pl
from jax.experimental.pallas import tpu as pltpu


def make_positional_encoding(d_model: int, max_len: int = 500) -> jnp.ndarray:
    """Deterministic sinusoidal PE table, identical math to the PyTorch __init__."""
    pos = jnp.arange(0, max_len, dtype=jnp.float32)[:, None]                 # (max_len, 1)
    div_term = jnp.exp(
        jnp.arange(0, d_model, 2, dtype=jnp.float32)
        * (-jnp.log(jnp.float32(10000.0)) / d_model)
    )                                                                         # (ceil(d/2),)
    angles = pos * div_term                                                   # (max_len, ceil(d/2))
    pe = jnp.zeros((max_len, d_model), dtype=jnp.float32)
    pe = pe.at[:, 0::2].set(jnp.sin(angles))
    pe = pe.at[:, 1::2].set(jnp.cos(angles)[:, : d_model // 2])
    return pe                                                                 # (max_len, d_model)


def _add_pe_kernel(x_ref, pe_ref, o_ref):
    # x_ref, pe_ref, o_ref are all (tR, D2); pe is fp32 so the add promotes.
    o_ref[...] = (x_ref[...] + pe_ref[...]).astype(o_ref.dtype)


def _lane_fold(S: int, D: int, max_fold: int = 128) -> tuple[int, int]:
    """Return (k, S_pad): fold k rows so k*D % 128 == 0, padding S up to a
    multiple of k.  Falls back to (1, S) only if no reasonable fold exists."""
    if D % 128 == 0:
        return 1, S
    k = 128 // math.gcd(D, 128)
    if k > max_fold:
        return 1, S  # unfolded layout: masked stores, still correct
    S_pad = -(-S // k) * k
    return k, S_pad


def _choose_rep(B: int, S2: int, D2: int, itemsize: int, sub: int,
                max_bytes: int = 4 << 20) -> int:
    """Batch elements per row tile.  tR = rep*S2 must be a multiple of 8
    (ideally of the dtype sublane pack) or equal the full row extent, must
    divide B*S2 exactly, and the block should be <= max_bytes (~4 MiB)."""
    R = B * S2
    slab = S2 * D2 * itemsize  # bytes of one batch element
    reps = [r for r in range(1, B + 1) if B % r == 0]

    def legal(r):
        tR = r * S2
        return (tR % 8 == 0) or (tR == R)

    def aligned(r):
        tR = r * S2
        return (tR % sub == 0) or (tR == R)

    for pred in (aligned, legal):
        cand = [r for r in reps if pred(r) and r * slab <= max_bytes]
        if cand:
            return max(cand)
    # Nothing fits under max_bytes with a legal tile below full extent:
    # take the smallest legal rep (rep == B, full extent, is always legal).
    return min(r for r in reps if legal(r))


class PositionalEncodingPallas:
    """JAX/Pallas equivalent of the PyTorch PositionalEncoding module."""

    def __init__(self, d_model: int, max_len: int = 500):
        self.d_model = d_model
        self.max_len = max_len
        self.pe = make_positional_encoding(d_model, max_len)   # (max_len, d_model) fp32
        self._cache = {}

    # --- cached pe views (computed once per (S, fold, rep)) -----------------
    def _pe_slice(self, S):
        key = ("slice", S)
        if key not in self._cache:
            self._cache[key] = self.pe[:S, :]
        return self._cache[key]

    def _pe_folded(self, S, k, S_pad):
        key = ("fold", S, k, S_pad)
        if key not in self._cache:
            p = self._pe_slice(S)
            if S_pad > S:
                p = jnp.pad(p, ((0, S_pad - S), (0, 0)))
            self._cache[key] = p.reshape(S_pad // k, self.d_model * k)
        return self._cache[key]

    def _pe_tiled(self, S, k, S_pad, rep):
        key = ("tile", S, k, S_pad, rep)
        if key not in self._cache:
            p2 = self._pe_folded(S, k, S_pad)
            self._cache[key] = jnp.tile(p2, (rep, 1)) if rep > 1 else p2
        return self._cache[key]

    # --- forward -------------------------------------------------------------
    def __call__(self, x: jnp.ndarray, *, force_pallas: bool = False) -> jnp.ndarray:
        B, S, D = x.shape
        assert D == self.d_model and S <= self.max_len
        out_dtype = jnp.result_type(x.dtype, jnp.float32)  # PyTorch-style promotion

        # Fast path: kernel launch costs more than the add for tiny tensors.
        if (not force_pallas) and x.size * x.dtype.itemsize < (1 << 19):
            return (x + self._pe_slice(S)[None, :, :]).astype(out_dtype)

        # Lane-density fold (+ row padding so the fold always applies).
        k, S_pad = _lane_fold(S, D)
        S2, D2 = S_pad // k, D * k
        R = B * S2

        if S_pad > S:
            x = jnp.pad(x, ((0, 0), (0, S_pad - S), (0, 0)))
        x2 = x.reshape(R, D2)

        itemsize = x.dtype.itemsize
        sub = {4: 8, 2: 16, 1: 32}.get(itemsize, 8)
        rep = _choose_rep(B, S2, D2, itemsize, sub)
        tR = rep * S2
        n_blocks = R // tR                                      # exact (rep | B)

        pe_blk = self._pe_tiled(S, k, S_pad, rep)               # (tR, D2) fp32, VMEM-resident

        # Scoped VMEM budget: x,out double-buffered + resident pe + slack,
        # capped for v7x's 64 MiB physical VMEM.
        out_itemsize = jnp.dtype(out_dtype).itemsize
        needed = (2 * tR * D2 * itemsize
                  + 2 * tR * D2 * out_itemsize
                  + 2 * tR * D2 * 4
                  + (2 << 20))
        vmem_limit = int(min(max(needed, 16 << 20), 56 << 20))

        out2 = pl.pallas_call(
            _add_pe_kernel,
            out_shape=jax.ShapeDtypeStruct((R, D2), out_dtype),
            grid_spec=pltpu.PrefetchScalarGridSpec(
                num_scalar_prefetch=0,
                grid=(n_blocks,),
                in_specs=[
                    pl.BlockSpec((tR, D2), lambda i: (i, 0)),   # x row tile
                    pl.BlockSpec((tR, D2), lambda i: (0, 0)),   # pe: constant -> fetched once
                ],
                out_specs=pl.BlockSpec((tR, D2), lambda i: (i, 0)),
            ),
            compiler_params=pltpu.CompilerParams(
                dimension_semantics=("parallel",),
                vmem_limit_bytes=vmem_limit,
            ),
        )(x2, pe_blk)

        out = out2.reshape(B, S_pad, D)
        if S_pad > S:
            out = out[:, :S, :]
        return out


if __name__ == "__main__":
    key = jax.random.PRNGKey(0)

    def check(B, S, D, dtype):
        mod = PositionalEncodingPallas(d_model=D, max_len=500)
        k1, _ = jax.random.split(jax.random.fold_in(key, B * 1000 + S * 10 + D))
        x = jax.random.normal(k1, (B, S, D), dtype=jnp.float32).astype(dtype)
        out = jax.block_until_ready(mod(x, force_pallas=True))
        ref = x + mod.pe[None, :S, :]                  # plain-JAX reference (promotes like torch)
        assert out.shape == (B, S, D), (out.shape, (B, S, D))
        assert out.dtype == ref.dtype
        assert jnp.allclose(out, ref, atol=1e-5, rtol=1e-5), f"mismatch at {(B, S, D, dtype)}"

    # Small shapes consistent with the module's forward: (batch, seq, d_model)
    check(2, 8, 32, jnp.float32)     # main case: fold k=4 -> lane-dense 128
    check(8, 16, 48, jnp.float32)    # multi-batch row tile (rep > 1)
    check(2, 6, 20, jnp.float32)     # fold requires row padding (S_pad > S)
    check(4, 8, 32, jnp.bfloat16)    # bf16 input, fp32 pe -> fp32 output (torch promotion)

    print("KERNEL_OK")
</pallas_src>

<mosaic_0001>
module attributes {stable_mosaic.version = 11 : i64} {
  func.func @_add_pe_kernel(%arg0: i32, %arg1: memref<4x128xf32, #tpu.memory_space<vmem>>, %arg2: memref<4x128xf32, #tpu.memory_space<vmem>>, %arg3: memref<4x128xf32, #tpu.memory_space<vmem>>) attributes {dimension_semantics = [#tpu.dimension_semantics<parallel>], iteration_bounds = array<i64: 1>, scalar_prefetch = 0 : i64, scratch_operands = 0 : i64, tpu.core_type = #tpu.core_type<tc>, window_params = [{transform_indices = @transform_0, window_bounds = array<i64: 4, 128>}, {pipeline_mode = #tpu.pipeline_mode<synchronous>, transform_indices = @transform_1, window_bounds = array<i64: 4, 128>}, {transform_indices = @transform_2, window_bounds = array<i64: 4, 128>}]} {
    %c0 = arith.constant 0 : index
    %c0_0 = arith.constant 0 : index
    %0 = vector.load %arg1[%c0, %c0_0] : memref<4x128xf32, #tpu.memory_space<vmem>>, vector<4x128xf32>
    %c0_1 = arith.constant 0 : index
    %c0_2 = arith.constant 0 : index
    %1 = vector.load %arg2[%c0_1, %c0_2] : memref<4x128xf32, #tpu.memory_space<vmem>>, vector<4x128xf32>
    %2 = arith.addf %0, %1 : vector<4x128xf32>
    %c0_3 = arith.constant 0 : index
    %c0_4 = arith.constant 0 : index
    %3 = vector.load %arg3[%c0_3, %c0_4] : memref<4x128xf32, #tpu.memory_space<vmem>>, vector<4x128xf32>
    tpu.vector_store %arg3[%c0_3, %c0_4], %2 {strides = array<i32>} : memref<4x128xf32, #tpu.memory_space<vmem>>, vector<4x128xf32>,
    return
  }
  func.func @transform_0(%arg0: i32) -> (i32, i32) {
    %c0_i32 = arith.constant 0 : i32
    %c0_i32_0 = arith.constant 0 : i32
    return %arg0, %c0_i32 : i32, i32
  }
  func.func @transform_1(%arg0: i32) -> (i32, i32) {
    %c0_i32 = arith.constant 0 : i32
    %c0_i32_0 = arith.constant 0 : i32
    %c0_i32_1 = arith.constant 0 : i32
    return %c0_i32, %c0_i32_0 : i32, i32
  }
  func.func @transform_2(%arg0: i32) -> (i32, i32) {
    %c0_i32 = arith.constant 0 : i32
    %c0_i32_0 = arith.constant 0 : i32
    return %arg0, %c0_i32 : i32, i32
  }
}

</mosaic_0001>

<llo_original>
// kernel: tpu_custom_call.1
$region0: #{tpu_custom_call.1}
  #allocation0 [shape = 'u32[]', space=smem, size = 0x4, offset = 0x4, fixed_abs, tag = 'smem constant byte address 0x4 - core index']
  #allocation1 [shape = 'u32[144,128]{1,0:T(1,128)}', space=vmem, size = 0x12000, scoped, tag = 'internal scratch']
  %s0 = inlined_call_operand.hbm [shape: f32[4,128], index: 0, kind: input, shape index: {}]
  %s1 = inlined_call_operand.hbm [shape: f32[4,128], index: 1, kind: input, shape index: {}]
  %s2 = inlined_call_operand.hbm [shape: f32[4,128], index: 2, kind: output, shape index: {}]
  %s3 = sld [smem:[#allocation0]]
  $region26: #{tpu_custom_call.1} parent=0
    _
  %s5 = ssub.s32 1, %s3
  %s6 = scalar_select 0, %s5, %s3
  $region1: #{tpu_custom_call.1} parent=0
    #allocation2 [shape = 'u8[2048]{0}', space=vmem, size = 0x800, scoped, tag = 'input window, operand 0, single buffered']
    #allocation3 [shape = 's32[1]{0}', space=sflag, size = 0x4, scoped, tag = 'scoped memory for tpu_custom_call.1']
    #allocation4 [shape = 's32[1]{0}', space=sflag, size = 0x4, scoped, tag = 'scoped memory for tpu_custom_call.1']
    #allocation5 [shape = 'u8[2048]{0}', space=vmem, size = 0x800, scoped, tag = 'input window, operand 1, single buffered']
    #allocation6 [shape = 's32[1]{0}', space=sflag, size = 0x4, scoped, tag = 'scoped memory for tpu_custom_call.1']
    #allocation7 [shape = 'u8[2048]{0}', space=vmem, size = 0x800, scoped, tag = 'output window, operand 0, single buffered']
    %7 = vsyncpa [#allocation3], 0
    %8 = vsyncpa [#allocation6], 0
    %9 = vsyncpa [#allocation4], 0
    // Predicated region
    $region2: #{tpu_custom_call.1} parent=1 // pred_check
      _
    $region3: #{tpu_custom_call.1} parent=1 // pred_check_branch
      %11 = sbr.rel (0) target = $region5
    $region4: #{tpu_custom_call.1} parent=1 // pred_region
      %s13 = ssub.s32 64, 64
      %14 = vsyncadd [#allocation3], %s13
      %s16 = sshll.u32 [#allocation2], 4
      %s17 = int_to_ptr.vmem [resolvable:$true] %s16
      %19 = dma.hbm_to_vmem [thread:$0]  %s0, 64, %s17, [#allocation3]
    $region5: #{tpu_custom_call.1} parent=1 // pred_fallthru
      _
    // Predicated region
    $region6: #{tpu_custom_call.1} parent=1 // pred_check
      _
    $region7: #{tpu_custom_call.1} parent=1 // pred_check_branch
      %21 = sbr.rel (0) target = $region9
    $region8: #{tpu_custom_call.1} parent=1 // pred_region
      %s23 = ssub.s32 64, 64
      %24 = vsyncadd [#allocation6], %s23
      %s26 = sshll.u32 [#allocation5], 4
      %s27 = int_to_ptr.vmem [resolvable:$true] %s26
      %29 = dma.hbm_to_vmem [thread:$0]  %s1, 64, %s27, [#allocation6]
    $region9: #{tpu_custom_call.1} parent=1 // pred_fallthru
      _
    // Predicated region
    $region10: #{tpu_custom_call.1} parent=1 // pred_check
      _
    $region11: #{tpu_custom_call.1} parent=1 // pred_check_branch
      %31 = sbr.rel (0) target = $region13
    $region12: #{tpu_custom_call.1} parent=1 // pred_region
      %32 = dma.done [#allocation3], 64
    $region13: #{tpu_custom_call.1} parent=1 // pred_fallthru
      _
    // Predicated region
    $region14: #{tpu_custom_call.1} parent=1 // pred_check
      _
    $region15: #{tpu_custom_call.1} parent=1 // pred_check_branch
      %34 = sbr.rel (0) target = $region17
    $region16: #{tpu_custom_call.1} parent=1 // pred_region
      %35 = dma.done [#allocation6], 64
    $region17: #{tpu_custom_call.1} parent=1 // pred_fallthru
      _
    %v36 = vld [vmem:[#allocation2] sm:$0xf]
    %v37 = vld [vmem:[#allocation5] sm:$0xf]
    %v38 = vadd.f32 %v36, %v37
    %39 = vst [vmem:[#allocation7] sm:$0xf] %v38
    // Predicated region
    $region18: #{tpu_custom_call.1} parent=1 // pred_check
      _
    $region19: #{tpu_custom_call.1} parent=1 // pred_check_branch
      %41 = sbr.rel (0) target = $region21
    $region20: #{tpu_custom_call.1} parent=1 // pred_region
      %s43 = ssub.s32 64, 64
      %44 = vsyncadd [#allocation4], %s43
      %s46 = sshll.u32 [#allocation7], 4
      %s47 = int_to_ptr.vmem [resolvable:$true] %s46
      %49 = dma.vmem_to_hbm [thread:$0]  %s47, 64, %s2, [#allocation4]
    $region21: #{tpu_custom_call.1} parent=1 // pred_fallthru
      _
    // Predicated region
    $region22: #{tpu_custom_call.1} parent=1 // pred_check
      _
    $region23: #{tpu_custom_call.1} parent=1 // pred_check_branch
      %51 = sbr.rel (0) target = $region25
    $region24: #{tpu_custom_call.1} parent=1 // pred_region
      %52 = dma.done [#allocation4], 64
    $region25: #{tpu_custom_call.1} parent=1 // pred_fallthru
      _
    %53 = vsyncpa [#allocation3], 1
    %54 = vsyncpa [#allocation6], 1
    %55 = vsyncpa [#allocation4], 1

</llo_original>
